<compile_context>
chip_gen: v5e
topology: v5e:2x2
jax: 0.10.0
libtpu: 0.0.40
codegen_flags: <defaults>
</compile_context>

<pallas_src>
import jax
import jax.numpy as jnp
import numpy as np
from jax import lax
from jax.experimental import pallas as pl
from jax.experimental.pallas import tpu as pltpu


_TINY = float(jnp.finfo(jnp.float32).tiny)  # torch clamp_probs epsilon for f32


# ---------------------------------------------------------------------------
# Tiling helpers
# ---------------------------------------------------------------------------
def _round_up(x, m):
    return ((x + m - 1) // m) * m


def _choose_block_rows(batch, num_cat, n_big, *, vmem_budget=8 << 20, max_rows=1024):
    """Largest multiple-of-8 row tile such that `n_big` double-buffered
    (rows, K) f32 tiles fit a conservative VMEM budget (v7x has only 64 MiB
    physical VMEM), while keeping the row grid >= 2 blocks so the 'parallel'
    grid axis can shard across v7x's two TensorCores."""
    bytes_per_row = max(num_cat, 128) * 4
    rows = vmem_budget // (2 * max(n_big, 1) * bytes_per_row)  # 2 = double buffer
    rows = max(8, min(max_rows, (rows // 8) * 8))
    if batch > 8:
        rows = min(rows, max(8, _round_up(pl.cdiv(batch, 2), 8)))  # grid len >= 2
    rows = min(rows, _round_up(batch, 8))
    return max(8, rows)


def _vmem_limit_bytes(block_rows, num_cat, n_big):
    tile = block_rows * _round_up(num_cat, 128) * 4
    need = 2 * max(n_big, 1) * tile + (1 << 20)          # double buffers + slack
    return int(min(max(4 * need, 8 << 20), 32 << 20))    # headroom, v7x-safe cap


def _compiler_params(block_rows, num_cat, n_big):
    return pltpu.CompilerParams(
        dimension_semantics=("parallel",),
        vmem_limit_bytes=_vmem_limit_bytes(block_rows, num_cat, n_big),
    )


# ---------------------------------------------------------------------------
# Kernel bodies
# ---------------------------------------------------------------------------
def _logits_from_probs(p):
    """p: (rows, K) f32, unnormalized non-negative probs -> (logits, row_sum).

    The lane reduction is over the logical K extent (Mosaic masks physical
    lane padding for non-multiple-of-128 K), and the one-hot gather below can
    never select a lane >= K since indices are in [0, K)."""
    s = jnp.sum(p, axis=-1, keepdims=True)                      # XLU lane reduce
    logits = jnp.log(jnp.maximum(p, _TINY)) - jnp.log(s)        # EUP log
    return logits, s


def _gather_rows(values, idx):
    """values: (rows, K) f32, idx: (rows, 1) i32 -> (rows, 1) values[r, idx[r]]."""
    lane = lax.broadcasted_iota(jnp.int32, values.shape, 1)
    return jnp.sum(jnp.where(lane == idx, values, 0.0), axis=-1, keepdims=True)


def _logits_kernel(probs_ref, logits_ref):
    p = probs_ref[...].astype(jnp.float32)
    logits, _ = _logits_from_probs(p)
    logits_ref[...] = logits.astype(logits_ref.dtype)


def _logits_probs_kernel(probs_ref, logits_ref, norm_ref):
    p = probs_ref[...].astype(jnp.float32)
    logits, s = _logits_from_probs(p)
    logits_ref[...] = logits.astype(logits_ref.dtype)
    # Exact reciprocal: one divide per *row* (not per element), so the approx
    # EUP path buys nothing and would miss the 1e-5 tolerance on probs_norm.
    norm_ref[...] = (p * pl.reciprocal(s, approx=False)).astype(norm_ref.dtype)


def _log_prob_kernel(logits_ref, idx_ref, lp_ref):
    lp = _gather_rows(logits_ref[...].astype(jnp.float32), idx_ref[...])
    lp_ref[...] = lp.astype(lp_ref.dtype)


def _fused_logits_log_prob_kernel(probs_ref, idx_ref, logits_ref, lp_ref):
    p = probs_ref[...].astype(jnp.float32)
    logits, _ = _logits_from_probs(p)
    logits_ref[...] = logits.astype(logits_ref.dtype)
    lp_ref[...] = _gather_rows(logits, idx_ref[...]).astype(lp_ref.dtype)


# ---------------------------------------------------------------------------
# pallas_call wrappers
# ---------------------------------------------------------------------------
def categorical_logits(probs, *, block_rows=None):
    """probs: (B, K) unnormalized -> logits (B, K) f32.  (No probs writeback.)"""
    B, K = probs.shape
    br = block_rows or _choose_block_rows(B, K, n_big=2)
    spec = pl.BlockSpec((br, K), lambda i: (i, 0))
    return pl.pallas_call(
        _logits_kernel,
        out_shape=jax.ShapeDtypeStruct((B, K), jnp.float32),
        grid_spec=pltpu.PrefetchScalarGridSpec(
            num_scalar_prefetch=0,
            grid=(pl.cdiv(B, br),),
            in_specs=[spec],
            out_specs=spec,
        ),
        compiler_params=_compiler_params(br, K, 2),
    )(probs)


def categorical_logits_and_probs(probs, *, block_rows=None):
    """probs: (B, K) unnormalized -> (logits, normalized_probs), both (B, K) f32."""
    B, K = probs.shape
    br = block_rows or _choose_block_rows(B, K, n_big=3)
    spec = pl.BlockSpec((br, K), lambda i: (i, 0))
    logits, norm = pl.pallas_call(
        _logits_probs_kernel,
        out_shape=(
            jax.ShapeDtypeStruct((B, K), jnp.float32),
            jax.ShapeDtypeStruct((B, K), jnp.float32),
        ),
        grid_spec=pltpu.PrefetchScalarGridSpec(
            num_scalar_prefetch=0,
            grid=(pl.cdiv(B, br),),
            in_specs=[spec],
            out_specs=(spec, spec),
        ),
        compiler_params=_compiler_params(br, K, 3),
    )(probs)
    return logits, norm


def categorical_log_prob(logits, x, *, block_rows=None):
    """logits: (B, K) f32; x: (B,) int category indices -> (B,) f32 log-probs."""
    B, K = logits.shape
    br = block_rows or _choose_block_rows(B, K, n_big=1)
    wide = pl.BlockSpec((br, K), lambda i: (i, 0))
    narrow = pl.BlockSpec((br, 1), lambda i: (i, 0))
    x2 = x.astype(jnp.int32).reshape(B, 1)
    out = pl.pallas_call(
        _log_prob_kernel,
        out_shape=jax.ShapeDtypeStruct((B, 1), jnp.float32),
        grid_spec=pltpu.PrefetchScalarGridSpec(
            num_scalar_prefetch=0,
            grid=(pl.cdiv(B, br),),
            in_specs=[wide, narrow],
            out_specs=narrow,
        ),
        compiler_params=_compiler_params(br, K, 1),
    )(logits, x2)
    return out.reshape(B)


def categorical_logits_and_log_prob(probs, x, *, block_rows=None):
    """Fused path: one pass over raw probs -> (logits (B,K), log_prob (B,)).
    Saves the extra full (B,K) HBM read of a separate log_prob kernel."""
    B, K = probs.shape
    br = block_rows or _choose_block_rows(B, K, n_big=2)
    wide = pl.BlockSpec((br, K), lambda i: (i, 0))
    narrow = pl.BlockSpec((br, 1), lambda i: (i, 0))
    x2 = x.astype(jnp.int32).reshape(B, 1)
    logits, lp = pl.pallas_call(
        _fused_logits_log_prob_kernel,
        out_shape=(
            jax.ShapeDtypeStruct((B, K), jnp.float32),
            jax.ShapeDtypeStruct((B, 1), jnp.float32),
        ),
        grid_spec=pltpu.PrefetchScalarGridSpec(
            num_scalar_prefetch=0,
            grid=(pl.cdiv(B, br),),
            in_specs=[wide, narrow],
            out_specs=(wide, narrow),
        ),
        compiler_params=_compiler_params(br, K, 2),
    )(probs, x2)
    return logits, lp.reshape(B)


# ---------------------------------------------------------------------------
# DistributionModule equivalent (Categorical backend).
# ---------------------------------------------------------------------------
class DistributionModule:
    """JAX/Pallas port of the torch DistributionModule wrapper
    (distribution = Categorical(probs=...)).

    forward(probs) registers the distribution parameters; the normalization /
    log math runs lazily in Pallas kernels (and is fused with log_prob when
    log_prob is the first consumer), which keeps results identical to the
    eager torch version while touching HBM only once per consumer."""

    def __init__(self, distribution="categorical", **kwargs):
        self.distribution = distribution
        self._raw_probs = None
        self._logits = None
        self._probs = None

    def forward(self, probs):
        self._raw_probs = probs
        self._logits = None
        self._probs = None
        return self

    __call__ = forward

    @property
    def logits(self):
        if self._logits is None:
            self._logits = categorical_logits(self._raw_probs)
        return self._logits

    @property
    def probs(self):
        if self._probs is None:
            self._logits, self._probs = categorical_logits_and_probs(self._raw_probs)
        return self._probs

    def log_prob(self, x):
        if self._logits is None:
            # Fused: one pass over raw probs yields both logits and log_prob.
            self._logits, lp = categorical_logits_and_log_prob(self._raw_probs, x)
            return lp
        return categorical_log_prob(self._logits, x)

    def sample_function(self, sample_shape, key):
        # Gumbel-max sampling over the Pallas-produced logits (plain-JAX glue).
        # TODO(synk): move into a Pallas kernel (pltpu.prng_seed/prng_random_bits
        # fused with the logits tiles) if sample_shape / K become large.
        B, K = self.logits.shape
        u = jax.random.uniform(key, tuple(sample_shape) + (B, K),
                               minval=1e-10, maxval=1.0)
        g = -jnp.log(-jnp.log(u))
        return jnp.argmax(self.logits[None, ...] + g, axis=-1)

    def sample(self, sample_shape=(1,), key=None):
        if key is None:
            key = jax.random.PRNGKey(0)
        return self.sample_function(sample_shape, key)

    def rsample(self, sample_shape=(1,), key=None):
        # TODO(synk): Categorical has no reparameterized sample; torch would
        # raise here, we simply return sample().
        return self.sample(sample_shape, key)

    def update_distribution(self, epoch=None):
        return None


# ---------------------------------------------------------------------------
if __name__ == "__main__":
    key = jax.random.PRNGKey(0)
    k_p, k_x, k_s, k_p2, k_x2 = jax.random.split(key, 5)

    # ----- Test 1: fused forward+log_prob, then probs / standalone gather -----
    B, K = 16, 128  # batch rows (sublanes) x num_categories (lane axis)
    probs_raw = jax.random.uniform(k_p, (B, K), jnp.float32,
                                   minval=0.1, maxval=1.0)
    x = jax.random.randint(k_x, (B,), 0, K, dtype=jnp.int32)

    mod = DistributionModule("categorical")
    mod(probs_raw)                               # forward(): lazy registration
    lp = mod.log_prob(x)                         # fused Pallas kernel
    jax.block_until_ready(lp)

    s = jnp.sum(probs_raw, axis=-1, keepdims=True)
    ref_logits = jnp.log(probs_raw) - jnp.log(s)
    ref_norm = probs_raw / s
    ref_lp = ref_logits[jnp.arange(B), x]

    assert np.allclose(np.asarray(lp), np.asarray(ref_lp), atol=1e-5, rtol=1e-5)
    assert np.allclose(np.asarray(mod.logits), np.asarray(ref_logits),
                       atol=1e-5, rtol=1e-5)

    # Standalone gather kernel over the cached logits.
    lp2 = categorical_log_prob(mod.logits, x)
    jax.block_until_ready(lp2)
    assert np.allclose(np.asarray(lp2), np.asarray(ref_lp), atol=1e-5, rtol=1e-5)

    # Normalized probs (optional output path).
    pn = mod.probs
    jax.block_until_ready(pn)
    assert np.allclose(np.asarray(pn), np.asarray(ref_norm), atol=1e-5, rtol=1e-5)

    # Sampling glue path.
    samples = mod.sample((2,), key=k_s)
    jax.block_until_ready(samples)
    assert samples.shape == (2, B)
    assert bool(jnp.all((samples >= 0) & (samples < K)))

    # ----- Test 2: non-multiple-of-block batch (partial blocks), logits-first --
    B2 = 20
    probs_raw2 = jax.random.uniform(k_p2, (B2, K), jnp.float32,
                                    minval=0.05, maxval=1.0)
    x2 = jax.random.randint(k_x2, (B2,), 0, K, dtype=jnp.int32)

    mod2 = DistributionModule("categorical")
    mod2(probs_raw2)
    lg2 = mod2.logits                            # logits-only Pallas kernel
    lp3 = mod2.log_prob(x2)                      # gather kernel (logits cached)
    jax.block_until_ready((lg2, lp3))

    s2 = jnp.sum(probs_raw2, axis=-1, keepdims=True)
    ref_logits2 = jnp.log(probs_raw2) - jnp.log(s2)
    ref_lp2 = ref_logits2[jnp.arange(B2), x2]
    assert np.allclose(np.asarray(lg2), np.asarray(ref_logits2),
                       atol=1e-5, rtol=1e-5)
    assert np.allclose(np.asarray(lp3), np.asarray(ref_lp2),
                       atol=1e-5, rtol=1e-5)

    print("KERNEL_OK")
</pallas_src>

<mosaic_0001>
module attributes {stable_mosaic.version = 11 : i64} {
  func.func @_fused_logits_log_prob_kernel(%arg0: i32, %arg1: memref<8x128xf32, #tpu.memory_space<vmem>>, %arg2: memref<8x1xi32, #tpu.memory_space<vmem>>, %arg3: memref<8x128xf32, #tpu.memory_space<vmem>>, %arg4: memref<8x1xf32, #tpu.memory_space<vmem>>) attributes {dimension_semantics = [#tpu.dimension_semantics<parallel>], iteration_bounds = array<i64: 2>, scalar_prefetch = 0 : i64, scratch_operands = 0 : i64, tpu.core_type = #tpu.core_type<tc>, window_params = [{transform_indices = @transform_0, window_bounds = array<i64: 8, 128>}, {transform_indices = @transform_1, window_bounds = array<i64: 8, 1>}, {transform_indices = @transform_2, window_bounds = array<i64: 8, 128>}, {transform_indices = @transform_3, window_bounds = array<i64: 8, 1>}]} {
    %c0 = arith.constant 0 : index
    %c0_0 = arith.constant 0 : index
    %0 = vector.load %arg1[%c0, %c0_0] : memref<8x128xf32, #tpu.memory_space<vmem>>, vector<8x128xf32>
    %cst = arith.constant dense<0.000000e+00> : vector<8xf32>
    %1 = vector.multi_reduction <add>, %0, %cst [1] : vector<8x128xf32> to vector<8xf32>
    %2 = vector.shape_cast %1 : vector<8xf32> to vector<8x1xf32>
    %cst_1 = arith.constant 1.17549435E-38 : f32
    %3 = vector.broadcast %cst_1 : f32 to vector<8x128xf32>
    %4 = arith.maximumf %0, %3 : vector<8x128xf32>
    %5 = math.log %4 : vector<8x128xf32>
    %6 = math.log %2 : vector<8x1xf32>
    %7 = vector.broadcast %6 : vector<8x1xf32> to vector<8x128xf32>
    %8 = arith.subf %5, %7 : vector<8x128xf32>
    %c0_2 = arith.constant 0 : index
    %c0_3 = arith.constant 0 : index
    %9 = vector.load %arg3[%c0_2, %c0_3] : memref<8x128xf32, #tpu.memory_space<vmem>>, vector<8x128xf32>
    tpu.vector_store %arg3[%c0_2, %c0_3], %8 {strides = array<i32>} : memref<8x128xf32, #tpu.memory_space<vmem>>, vector<8x128xf32>,
    %c0_4 = arith.constant 0 : index
    %c0_5 = arith.constant 0 : index
    %10 = vector.load %arg2[%c0_4, %c0_5] : memref<8x1xi32, #tpu.memory_space<vmem>>, vector<8x1xi32>
    %11 = tpu.iota {dimensions = array<i32: 1>} : vector<8x128xi32>
    %12 = vector.broadcast %10 : vector<8x1xi32> to vector<8x128xi32>
    %13 = arith.cmpi eq, %11, %12 : vector<8x128xi32>
    %cst_6 = arith.constant 0.000000e+00 : f32
    %14 = vector.broadcast %cst_6 : f32 to vector<8x128xf32>
    %15 = arith.select %13, %8, %14 : vector<8x128xi1>, vector<8x128xf32>
    %cst_7 = arith.constant dense<0.000000e+00> : vector<8xf32>
    %16 = vector.multi_reduction <add>, %15, %cst_7 [1] : vector<8x128xf32> to vector<8xf32>
    %17 = vector.shape_cast %16 : vector<8xf32> to vector<8x1xf32>
    %c0_8 = arith.constant 0 : index
    %c0_9 = arith.constant 0 : index
    %18 = vector.load %arg4[%c0_8, %c0_9] : memref<8x1xf32, #tpu.memory_space<vmem>>, vector<8x1xf32>
    tpu.vector_store %arg4[%c0_8, %c0_9], %17 {strides = array<i32>} : memref<8x1xf32, #tpu.memory_space<vmem>>, vector<8x1xf32>,
    return
  }
  func.func @transform_0(%arg0: i32) -> (i32, i32) {
    %c0_i32 = arith.constant 0 : i32
    %c0_i32_0 = arith.constant 0 : i32
    return %arg0, %c0_i32 : i32, i32
  }
  func.func @transform_1(%arg0: i32) -> (i32, i32) {
    %c0_i32 = arith.constant 0 : i32
    %c0_i32_0 = arith.constant 0 : i32
    return %arg0, %c0_i32 : i32, i32
  }
  func.func @transform_2(%arg0: i32) -> (i32, i32) {
    %c0_i32 = arith.constant 0 : i32
    %c0_i32_0 = arith.constant 0 : i32
    return %arg0, %c0_i32 : i32, i32
  }
  func.func @transform_3(%arg0: i32) -> (i32, i32) {
    %c0_i32 = arith.constant 0 : i32
    %c0_i32_0 = arith.constant 0 : i32
    return %arg0, %c0_i32 : i32, i32
  }
}

</mosaic_0001>

<llo_original>
// kernel: tpu_custom_call.1
$region0: #{tpu_custom_call.1}
  #allocation0 [shape = 'u32[]', space=smem, size = 0x4, offset = 0x4, fixed_abs, tag = 'smem constant byte address 0x4 - core index']
  #allocation1 [shape = 'u32[72,128]{1,0:T(1,128)}', space=vmem, size = 0x9000, scoped, tag = 'internal scratch']
  %s0 = inlined_call_operand.vmem [shape: f32[16,128], index: 0, kind: input, shape index: {}]
  %s1 = inlined_call_operand.vmem [shape: s32[16,1], index: 1, kind: input, shape index: {}]
  %s2 = inlined_call_operand.hbm [shape: f32[16,128], index: 2, kind: output, shape index: {0}]
  %s3 = inlined_call_operand.vmem [shape: f32[16,1], index: 3, kind: output, shape index: {1}]
  %4 = xla_tuple %s2, %s3
  %s5 = sld [smem:[#allocation0]]
  $region49: #{tpu_custom_call.1} parent=0
    _
  %s7 = ssub.s32 1, %s5
  %s8 = scalar_select 0, %s7, %s5
  $region1: #{tpu_custom_call.1} parent=0
    #allocation2 [shape = 'u8[8192]{0}', space=vmem, size = 0x2000, scoped, tag = 'output window, operand 0']
    #allocation3 [shape = 's32[2]{0}', space=sflag, size = 0x8, scoped, tag = 'scoped memory for tpu_custom_call.1']
    %9 = vsyncpa [#allocation3], 0
    %s10 = scalar_lea.sflag [#allocation3], 1
    %11 = vsyncpa %s10, 0
    loop: start=0, step=1, limit=4
    $region2: #{tpu_custom_call.1} parent=1 // loop_pre_header
      _
    $region3: #{tpu_custom_call.1} parent=1 // loop_header
      %s13 = sphi 0, %s17
      %p14 = scmp.ge.s32.totalorder %s13, 4
      %s23 = sphi 0, %s25
      %s26 = sphi 0, %s23
      %s27 = sphi 0, %s26
      %s43 = sphi 0, %s27
      %s49 = sphi 0, %s51
      %s52 = sphi 0, %s49
      %s53 = sphi 0, %s52
      %s69 = sphi 0, %s53
      %s75 = sphi 0, %s77
      %s78 = sphi 0, %s75
      %s79 = sphi 0, %s78
      %s95 = sphi 0, %s79
      %s101 = sphi 0, %s103
      %s104 = sphi 0, %s101
      %s105 = sphi 0, %s104
      %s121 = sphi 0, %s105
    $region4: #{tpu_custom_call.1} parent=1 // loop_header_branch
      %16 = sbr.rel (%p14) target = $region8
    $region5: #{tpu_custom_call.1} parent=1 // loop_body
      %s18 = ssub.s32 %s13, 1
      %s19 = ssub.s32 %s13, 2
      %s20 = sadd.s32 %s13, 1
      %s21 = ssub.s32 %s13, %s20
      %p22 = scmp.eq.s32.totalorder %s21, 0
      %s24 = sadd.s32 %s23, 1
      %s25 = scalar_select %p22, %s23, %s24
      %p28 = pneg %p22
      %p29 = scmp.eq.s32.totalorder %s13, 1
      %p30 = por %p28, %p29
      %p31 = scmp.ne.s32.totalorder %s23, %s26
      %p32 = scmp.eq.s32.totalorder %s13, 0
      %p33 = por %p31, %p32
      %p34 = scmp.ne.s32.totalorder %s23, %s26
      %p35 = scmp.eq.s32.totalorder %s18, 1
      %p36 = por %p34, %p35
      %p37 = scmp.ne.s32.totalorder %s26, %s27
      %p38 = scmp.eq.s32.totalorder %s18, 0
      %p39 = por %p37, %p38
      %p40 = scmp.ne.s32.totalorder %s26, %s27
      %p41 = scmp.eq.s32.totalorder %s19, 1
      %p42 = por %p40, %p41
      %p44 = scmp.ne.s32.totalorder %s27, %s43
      %p45 = scmp.eq.s32.totalorder %s19, 0
      %p46 = por %p44, %p45
      %s47 = ssub.s32 %s13, %s20
      %p48 = scmp.eq.s32.totalorder %s47, 0
      %s50 = sadd.s32 %s49, 1
      %s51 = scalar_select %p48, %s49, %s50
      %p54 = pneg %p48
      %p55 = scmp.eq.s32.totalorder %s13, 1
      %p56 = por %p54, %p55
      %p57 = scmp.ne.s32.totalorder %s49, %s52
      %p58 = scmp.eq.s32.totalorder %s13, 0
      %p59 = por %p57, %p58
      %p60 = scmp.ne.s32.totalorder %s49, %s52
      %p61 = scmp.eq.s32.totalorder %s18, 1
      %p62 = por %p60, %p61
      %p63 = scmp.ne.s32.totalorder %s52, %s53
      %p64 = scmp.eq.s32.totalorder %s18, 0
      %p65 = por %p63, %p64
      %p66 = scmp.ne.s32.totalorder %s52, %s53
      %p67 = scmp.eq.s32.totalorder %s19, 1
      %p68 = por %p66, %p67
      %p70 = scmp.ne.s32.totalorder %s53, %s69
      %p71 = scmp.eq.s32.totalorder %s19, 0
      %p72 = por %p70, %p71
      %s73 = ssub.s32 %s13, %s20
      %p74 = scmp.eq.s32.totalorder %s73, 0
      %s76 = sadd.s32 %s75, 1
      %s77 = scalar_select %p74, %s75, %s76
      %p80 = pneg %p74
      %p81 = scmp.eq.s32.totalorder %s13, 1
      %p82 = por %p80, %p81
      %p83 = scmp.ne.s32.totalorder %s75, %s78
      %p84 = scmp.eq.s32.totalorder %s13, 0
      %p85 = por %p83, %p84
      %p86 = scmp.ne.s32.totalorder %s75, %s78
      %p87 = scmp.eq.s32.totalorder %s18, 1
      %p88 = por %p86, %p87
      %p89 = scmp.ne.s32.totalorder %s78, %s79
      %p90 = scmp.eq.s32.totalorder %s18, 0
      %p91 = por %p89, %p90
      %p92 = scmp.ne.s32.totalorder %s78, %s79
      %p93 = scmp.eq.s32.totalorder %s19, 1
      %p94 = por %p92, %p93
      %p96 = scmp.ne.s32.totalorder %s79, %s95
      %p97 = scmp.eq.s32.totalorder %s19, 0
      %p98 = por %p96, %p97
      %s99 = ssub.s32 %s13, %s20
      %p100 = scmp.eq.s32.totalorder %s99, 0
      %s102 = sadd.s32 %s101, 1
      %s103 = scalar_select %p100, %s101, %s102
      %p106 = pneg %p100
      %p107 = scmp.eq.s32.totalorder %s13, 1
      %p108 = por %p106, %p107
      %p109 = scmp.ne.s32.totalorder %s101, %s104
      %p110 = scmp.eq.s32.totalorder %s13, 0
      %p111 = por %p109, %p110
      %p112 = scmp.ne.s32.totalorder %s101, %s104
      %p113 = scmp.eq.s32.totalorder %s18, 1
      %p114 = por %p112, %p113
      %p115 = scmp.ne.s32.totalorder %s104, %s105
      %p116 = scmp.eq.s32.totalorder %s18, 0
      %p117 = por %p115, %p116
      %p118 = scmp.ne.s32.totalorder %s104, %s105
      %p119 = scmp.eq.s32.totalorder %s19, 1
      %p120 = por %p118, %p119
      %p122 = scmp.ne.s32.totalorder %s105, %s121
      %p123 = scmp.eq.s32.totalorder %s19, 0
      %p124 = por %p122, %p123
      %p125 = scmp.le.s32.totalorder 1, %s13
      %p126 = scmp.lt.s32.totalorder %s13, 3
      %p127 = pnand %p125, %p126
      %p128 = pneg %p127
      // Predicated region
      $region9: #{tpu_custom_call.1} parent=5 // pred_check
        _
      $region10: #{tpu_custom_call.1} parent=5 // pred_check_branch
        %130 = sbr.rel (%p127) target = $region12
      $region11: #{tpu_custom_call.1} parent=5 // pred_region
        %s131 = ssub.s32 %s13, 1
      $region12: #{tpu_custom_call.1} parent=5 // pred_fallthru
        _
      %p132 = scmp.lt.s32.totalorder %s13, 2
      // Predicated region
      $region13: #{tpu_custom_call.1} parent=5 // pred_check
        %p133 = pneg %p132
      $region14: #{tpu_custom_call.1} parent=5 // pred_check_branch
        %135 = sbr.rel (%p133) target = $region16
      $region15: #{tpu_custom_call.1} parent=5 // pred_region
        // Predicated region
        $region17: #{tpu_custom_call.1} parent=15 // pred_check
          %p136 = pneg %p33
        $region18: #{tpu_custom_call.1} parent=15 // pred_check_branch
          %138 = sbr.rel (%p136) target = $region20
        $region19: #{tpu_custom_call.1} parent=15 // pred_region
          %p139 = scmp.lt.s32.totalorder %s13, 1
          %s140 = scalar_select %p139, %s13, 1
          %s141 = smul.addr %s140, 8
          %s142 = scalar_lea.vmem %s0, %s141
        $region20: #{tpu_custom_call.1} parent=15 // pred_fallthru
          _
        // Predicated region
        $region21: #{tpu_custom_call.1} parent=15 // pred_check
          %p143 = pneg %p59
        $region22: #{tpu_custom_call.1} parent=15 // pred_check_branch
          %145 = sbr.rel (%p143) target = $region24
        $region23: #{tpu_custom_call.1} parent=15 // pred_region
          %p146 = scmp.lt.s32.totalorder %s13, 1
          %s147 = scalar_select %p146, %s13, 1
          %s148 = smul.addr %s147, 8
          %s149 = scalar_lea.vmem %s1, %s148
        $region24: #{tpu_custom_call.1} parent=15 // pred_fallthru
          _
      $region16: #{tpu_custom_call.1} parent=5 // pred_fallthru
        _
      %p150 = scmp.le.s32.totalorder 1, %s13
      %p151 = scmp.lt.s32.totalorder %s13, 3
      %p152 = pnand %p150, %p151
      %p153 = pneg %p152
      // Predicated region
      $region25: #{tpu_custom_call.1} parent=5 // pred_check
        _
      $region26: #{tpu_custom_call.1} parent=5 // pred_check_branch
        %155 = sbr.rel (%p152) target = $region28
      $region27: #{tpu_custom_call.1} parent=5 // pred_region
        %s156 = ssub.s32 %s13, 1
        %p157 = scmp.lt.s32.totalorder %s18, 1
        %s158 = scalar_select %p157, %s18, 1
        %s159 = smul.addr %s158, 8
        %s160 = scalar_lea.vmem %s0, %s159
        %p161 = pneg %p39
        %p162 = pneg %p36
        %p163 = scmp.lt.s32.totalorder %s18, 1
        %s164 = scalar_select %p163, %s18, 1
        %s165 = smul.addr %s164, 8
        %s166 = scalar_lea.vmem %s1, %s165
        %p167 = pneg %p65
        %p168 = pneg %p62
        %p169 = pneg %p91
        %p170 = pneg %p88
        %s171 = sand.u32 %s78, 1
        %s172 = scalar_lea.sflag [#allocation3], %s171
        %s173 = sand.u32 %s78, 1
        %s174 = smul.addr %s173, 8
        %s175 = scalar_lea.vmem [#allocation2], %s174
        %p176 = pneg %p117
        %p177 = pneg %p114
        %p178 = scmp.lt.s32.totalorder %s18, 1
        %s179 = scalar_select %p178, %s18, 1
        %s180 = smul.addr %s179, 8
        %s181 = scalar_lea.vmem %s3, %s180
        %p182 = scmp.lt.s32.totalorder %s18, 1
        %s183 = scalar_select %p182, %s18, 1
        %s184 = smul.addr %s183, 8
        %s185 = scalar_lea.vmem %s0, %s184
        %p186 = scmp.lt.s32.totalorder %s18, 1
        %s187 = scalar_select %p186, %s18, 1
        %s188 = smul.addr %s187, 8
        %s189 = scalar_lea.vmem %s1, %s188
        %p190 = scmp.lt.s32.totalorder %s18, 1
        %s191 = scalar_select %p190, %s18, 1
        %s192 = smul.addr %s191, 8
        %s193 = scalar_lea.vmem %s3, %s192
        %v194 = vld [vmem:[%s185] sm:$0xff]
        %195 = vadd.xlane.f32.xlu0 %v194
        %v196 = vpop.xlane.xlu0 %195
        %v197 = vmax.f32 %v194, 1.1754944e-38
        %v198 = vlog2.pop %v197
        %v199 = vmul.f32 %v198, 0.6931472
        %v200 = vlog2.pop %v196
        %v201 = vmul.f32 %v200, 0.6931472
        %v202 = vsub.f32 %v199, %v201
        %203 = vst [vmem:[%s175] sm:$0xff] %v202
        %v204 = vld [vmem:[%s189] sm:$0xff]
        %v205 = vlaneseq
        %v206 = vand.u32 %v205, 127
        %207 = vset.pattern.permute.xlu0 0
        %208 = vperm.xlu0 %207, %v204
        %v209 = vpop.permute.xlu0 %208
        %vm210 = vcmp.eq.s32.totalorder %v206, %v209
        %v211 = vsel %vm210, %v202, 0.0
        %212 = vadd.xlane.f32.xlu0 %v211
        %v213 = vpop.xlane.xlu0 %212
        %vm214 = vcmask 7168
        %215 = vst.msk [vmem:[%s193] sm:$0xff] %vm214, %v213
        %s216 = sand.u32 %s78, 1
        %s217 = scalar_lea.sflag [#allocation3], %s216
        %s218 = sand.u32 %s78, 1
        %s219 = smul.addr %s218, 8
        %s220 = scalar_lea.vmem [#allocation2], %s219
        %p221 = scmp.lt.s32.totalorder %s18, 1
        %s222 = scalar_select %p221, %s18, 1
        %s223 = smul.addr %s222, 8
        %s224 = scalar_lea.vmem %s3, %s223
        // Predicated region
        $region29: #{tpu_custom_call.1} parent=27 // pred_check
          %p225 = pneg %p88
        $region30: #{tpu_custom_call.1} parent=27 // pred_check_branch
          %227 = sbr.rel (%p225) target = $region32
        $region31: #{tpu_custom_call.1} parent=27 // pred_region
          %229 = vsyncadd %s217, 0
          %s230 = smul.addr %s18, 8
          %s231 = scalar_lea.hbm %s2, %s230
          %s233 = sshll.u32 %s220, 4
          %s234 = int_to_ptr.vmem [resolvable:$true] %s233
          %s235 = sshll.u32 %s231, 4
          %s236 = int_to_ptr.hbm [resolvable:$true] %s235
          %238 = dma.vmem_to_hbm [thread:$0]  %s234, 128, %s236, %s217
        $region32: #{tpu_custom_call.1} parent=27 // pred_fallthru
          _
        // Predicated region
        $region33: #{tpu_custom_call.1} parent=27 // pred_check
          %p239 = pneg %p114
        $region34: #{tpu_custom_call.1} parent=27 // pred_check_branch
          %241 = sbr.rel (%p239) target = $region36
        $region35: #{tpu_custom_call.1} parent=27 // pred_region
          _
        $region36: #{tpu_custom_call.1} parent=27 // pred_fallthru
          _
      $region28: #{tpu_custom_call.1} parent=5 // pred_fallthru
        _
      %p242 = scmp.le.s32.totalorder 2, %s13
      // Predicated region
      $region37: #{tpu_custom_call.1} parent=5 // pred_check
        %p243 = pneg %p242
      $region38: #{tpu_custom_call.1} parent=5 // pred_check_branch
        %245 = sbr.rel (%p243) target = $region40
      $region39: #{tpu_custom_call.1} parent=5 // pred_region
        %s246 = ssub.s32 %s13, 2
        // Predicated region
        $region41: #{tpu_custom_call.1} parent=39 // pred_check
          %p247 = pneg %p94
        $region42: #{tpu_custom_call.1} parent=39 // pred_check_branch
          %249 = sbr.rel (%p247) target = $region44
        $region43: #{tpu_custom_call.1} parent=39 // pred_region
          %s250 = sand.u32 %s79, 1
          %s251 = scalar_lea.sflag [#allocation3], %s250
          %s252 = sand.u32 %s79, 1
          %s253 = smul.addr %s252, 8
          %s254 = scalar_lea.vmem [#allocation2], %s253
          %256 = dma.done %s251, 128
        $region44: #{tpu_custom_call.1} parent=39 // pred_fallthru
          _
        // Predicated region
        $region45: #{tpu_custom_call.1} parent=39 // pred_check
          %p257 = pneg %p120
        $region46: #{tpu_custom_call.1} parent=39 // pred_check_branch
          %259 = sbr.rel (%p257) target = $region48
        $region47: #{tpu_custom_call.1} parent=39 // pred_region
          %p260 = scmp.lt.s32.totalorder %s19, 1
          %s261 = scalar_select %p260, %s19, 1
          %s262 = smul.addr %s261, 8
          %s263 = scalar_lea.vmem %s3, %s262
        $region48: #{tpu_custom_call.1} parent=39 // pred_fallthru
          _
      $region40: #{tpu_custom_call.1} parent=5 // pred_fallthru
        _
    $region6: #{tpu_custom_call.1} parent=1 // loop_footer
      %s17 = sadd.s32 1, %s13
    $region7: #{tpu_custom_call.1} parent=1 // loop_footer_branch
      %12 = sbr.rel target = $region3
    $region8: #{tpu_custom_call.1} parent=1 // loop_exit
      _
    %264 = vsyncpa [#allocation3], 1
    %s265 = scalar_lea.sflag [#allocation3], 1
    %266 = vsyncpa %s265, 1

</llo_original>
